<compile_context>
chip_gen: v7x
topology: tpu7x:2x2x1
jax: 0.10.0
libtpu: 0.0.40
codegen_flags: <defaults>
</compile_context>

<pallas_src>
import jax
import jax.numpy as jnp
from jax.experimental import pallas as pl
from jax.experimental.pallas import tpu as pltpu


# ----------------------------------------------------------------------------
# Kernel
# ----------------------------------------------------------------------------
def _make_fm_kernel(tile_b, sub_tb, k):
    """Build the FM kernel for fixed (tile_b, sub_tb, k)."""
    n_chunks = tile_b // sub_tb
    assert n_chunks * sub_tb == tile_b

    def fm_kernel(x_ref, vaug_t_ref, s_ref, b_ref, o_ref):
        # x_ref      : (tile_b, F)  native dtype, pipelined batch tile
        # vaug_t_ref : (K+1, F)     f32, [v | w].T, grid-invariant (resident)
        # s_ref      : (F, 1)       f32, rowsum(v*v), grid-invariant (resident)
        # b_ref      : (1, 1)       SMEM, linear bias
        # o_ref      : (1, tile_b)  f32, lane-dense output tile
        vaug_t = vaug_t_ref[...]                  # (K+1, F)
        s_col = s_ref[...]                        # (F, 1)
        bias = b_ref[0, 0]

        # Static sub-chunk loop: DMA granularity (tile_b) is decoupled from the
        # compute granularity (sub_tb) so f32 temporaries stay ~1 MiB.
        for c in range(n_chunks):
            off = c * sub_tb                      # compile-time offset
            x = x_ref[pl.ds(off, sub_tb), :].astype(jnp.float32)   # (sub, F)
            xt = x.T                                               # (F, sub)

            # One MXU pass: factor projection + linear term, batch on lanes.
            xvw = jnp.dot(vaug_t, xt,
                          preferred_element_type=jnp.float32)      # (K+1, sub)

            # sum_k (x^2 @ v^2)_k == sum_f x_f^2 * rowsum(v^2)_f   (exact).
            xxs = jnp.sum((xt * xt) * s_col, axis=0, keepdims=True)  # (1, sub)

            lin = xvw[k:k + 1, :]                                    # (1, sub)
            # sum_k xv_k^2 == sum over all K+1 rows of xvw^2 minus lin^2 (exact).
            sq = jnp.sum(xvw * xvw, axis=0, keepdims=True)           # (1, sub)
            inter = 0.5 * (sq - lin * lin - xxs)                     # (1, sub)

            o_ref[:, pl.ds(off, sub_tb)] = (lin + bias + inter).astype(o_ref.dtype)

    return fm_kernel


# ----------------------------------------------------------------------------
# Tiling / VMEM helpers (padding-aware)
# ----------------------------------------------------------------------------
def _round_up(x, m):
    return -(-x // m) * m


def _vmem_buf_bytes(rows, cols, itemsize):
    """VMEM bytes of a (rows, cols) buffer under the TPU (8,128)-tiled layout."""
    sublane = 8 * max(1, 4 // itemsize)           # 8 for f32, 16 for bf16
    return _round_up(max(rows, 1), sublane) * _round_up(max(cols, 1), 128) * itemsize


def _vmem_estimate(tile_b, sub_tb, F, K, x_itemsize):
    """Per-step VMEM footprint (bytes), double-buffering and lane padding included."""
    x_buf = _vmem_buf_bytes(tile_b, F, x_itemsize)        # pipelined x tile
    out_buf = _vmem_buf_bytes(1, tile_b, 4)               # lane-dense output tile
    resident = _vmem_buf_bytes(K + 1, F, 4) + _vmem_buf_bytes(F, 1, 4)
    chunk = (2 * _vmem_buf_bytes(sub_tb, F, 4)            # x upcast (+slack)
             + 4 * _vmem_buf_bytes(F, sub_tb, 4)          # x.T, squares, weighted
             + 4 * _vmem_buf_bytes(K + 1, sub_tb, 4))     # xvw, xvw^2, row vectors
    return 2 * (x_buf + out_buf) + resident + chunk


def _divisors(n):
    ds, i = set(), 1
    while i * i <= n:
        if n % i == 0:
            ds.add(i)
            ds.add(n // i)
        i += 1
    return sorted(ds)


def _pick_sub_tb(tile_b, mult, target=512, max_chunks=32):
    """Largest divisor of tile_b that is <= max(target, tile_b/max_chunks) and a
    multiple of `mult` (falls back to the full tile -> single chunk)."""
    cap = max(target, -(-tile_b // max_chunks))
    if tile_b <= cap:
        return tile_b
    for d in range(min(cap, tile_b), mult - 1, -1):
        if d % mult == 0 and tile_b % d == 0:
            return d
    return tile_b


def _pick_tile_b(B, F, K, x_itemsize, target_bytes, vmem_budget):
    """Byte-sized batch tile: a divisor of B, multiple of the sublane granule,
    ~target_bytes of raw x, fitting the padded VMEM budget, preferring grid >= 2
    (even if cheap) so the batch axis can shard across TensorCores."""
    mult = 8 * max(1, 4 // x_itemsize)
    target_rows = max(mult, target_bytes // (F * x_itemsize))

    def fits(t):
        return _vmem_estimate(t, _pick_sub_tb(t, mult), F, K, x_itemsize) <= vmem_budget

    cands = [d for d in _divisors(B) if d % mult == 0 and B // d >= 2 and fits(d)]
    within = [d for d in cands if d <= target_rows]
    if within:
        best = max(within)
        even = [d for d in within if (B // d) % 2 == 0]
        if even and max(even) * 2 >= best:        # accept <=2x smaller tile for even grid
            return max(even)
        return best
    if cands:                                      # everything fitting is above target
        return min(cands)
    return B                                       # single full-extent block fallback


def _vmem_capacity_bytes():
    try:
        cap = int(pltpu.get_tpu_info().vmem_capacity_bytes)
        if cap > 0:
            return cap
    except Exception:
        pass
    return 64 << 20  # conservative default (v7x per-core VMEM)


# ----------------------------------------------------------------------------
# Wrapper
# ----------------------------------------------------------------------------
def factorization_machine(x, w, b, v, *, tile_b=None):
    """FM forward.  x: (B, F) [f32 or bf16], w: (F, 1), b: (1, 1), v: (F, K) -> (B, 1)."""
    B, F = x.shape
    K = v.shape[1]
    x_itemsize = jnp.dtype(x.dtype).itemsize
    mult = 8 * max(1, 4 // x_itemsize)

    vmem_cap = _vmem_capacity_bytes()
    tile_budget = int(0.55 * vmem_cap)
    target_bytes = 8 << 20          # ~8 MiB of raw x per grid step

    if tile_b is None:
        tile_b = _pick_tile_b(B, F, K, x_itemsize, target_bytes, tile_budget)
    assert B % tile_b == 0, "batch must be divisible by tile_b"
    assert tile_b % mult == 0 or tile_b == B, (
        "tile_b must be a multiple of the sublane granule (or the full batch)")

    sub_tb = _pick_sub_tb(tile_b, mult)
    num_tiles = B // tile_b

    # Grid-invariant parameter prep (tiny, one-time):
    v32 = v.astype(jnp.float32)
    vaug_t = jnp.concatenate([v32, w.astype(jnp.float32)], axis=1).T    # (K+1, F)
    s_col = jnp.sum(v32 * v32, axis=1, keepdims=True)                   # (F, 1)

    est = _vmem_estimate(tile_b, sub_tb, F, K, x_itemsize)
    vmem_limit = int(min(0.75 * vmem_cap, max(32 << 20, 1.4 * est + (4 << 20))))

    kernel = _make_fm_kernel(tile_b, sub_tb, K)
    out = pl.pallas_call(
        kernel,
        out_shape=jax.ShapeDtypeStruct((num_tiles, tile_b), jnp.float32),
        grid_spec=pltpu.PrefetchScalarGridSpec(
            num_scalar_prefetch=0,
            grid=(num_tiles,),
            in_specs=[
                pl.BlockSpec((tile_b, F), lambda i: (i, 0)),         # x tile (pipelined)
                pl.BlockSpec((K + 1, F), lambda i: (0, 0)),          # [v | w].T (resident)
                pl.BlockSpec((F, 1), lambda i: (0, 0)),              # rowsum(v^2) (resident)
                pl.BlockSpec((1, 1), lambda i: (0, 0),
                             memory_space=pltpu.SMEM),               # bias scalar
            ],
            out_specs=pl.BlockSpec((1, tile_b), lambda i: (i, 0)),   # lane-dense output
        ),
        compiler_params=pltpu.CompilerParams(
            dimension_semantics=("parallel",),
            vmem_limit_bytes=vmem_limit),
    )(x, vaug_t, s_col, b.astype(jnp.float32))

    return out.reshape(B, 1)


# ----------------------------------------------------------------------------
# Reference + test harness
# ----------------------------------------------------------------------------
def fm_reference(x, w, b, v):
    """Pure-JAX reference mirroring the PyTorch forward (math in f32)."""
    x = x.astype(jnp.float32)
    lin = x @ w + b[0, 0]
    xv = x @ v
    xv2 = (x ** 2) @ (v ** 2)
    inter = 0.5 * jnp.sum(xv ** 2 - xv2, axis=1, keepdims=True)
    return lin + inter


def _run_case(key, B, F, K, x_dtype=jnp.float32, atol=1e-5, rtol=1e-5):
    kx, kw, kb, kv = jax.random.split(key, 4)
    bound = 1.0 / (F ** 0.5)
    # nn.Linear(F, 1): weight (1, F) stored transposed as (F, 1); bias -> (1, 1).
    w_t = jax.random.uniform(kw, (F, 1), jnp.float32, -bound, bound)
    b = jax.random.uniform(kb, (1, 1), jnp.float32, -bound, bound)
    v = jax.random.normal(kv, (F, K), jnp.float32) * 0.01
    x = jax.random.normal(kx, (B, F), jnp.float32).astype(x_dtype)

    out = jax.block_until_ready(factorization_machine(x, w_t, b, v))
    ref = fm_reference(x, w_t, b, v)
    assert out.shape == (B, 1), out.shape
    err = jnp.max(jnp.abs(out - ref))
    assert jnp.allclose(out, ref, atol=atol, rtol=rtol), f"max abs err {err}"


if __name__ == "__main__":
    key = jax.random.PRNGKey(0)
    k1, k2, k3 = jax.random.split(key, 3)

    # Small shapes consistent with the module: n_features=32/64, k=16.
    _run_case(k1, B=8, F=32, K=16)                                  # grid=1, single chunk
    _run_case(k2, B=256, F=64, K=16)                                # grid=2, pipelined
    # Native-dtype (bf16) x path + in-kernel sub-chunk loop (2 chunks / tile).
    _run_case(k3, B=2048, F=64, K=16, x_dtype=jnp.bfloat16, atol=2e-2, rtol=2e-2)

    print("KERNEL_OK")
</pallas_src>

<mosaic_0001>
module attributes {stable_mosaic.version = 11 : i64} {
  func.func @fm_kernel(%arg0: i32, %arg1: memref<8x32xf32, #tpu.memory_space<vmem>>, %arg2: memref<17x32xf32, #tpu.memory_space<vmem>>, %arg3: memref<32x1xf32, #tpu.memory_space<vmem>>, %arg4: memref<1x1xf32, #tpu.memory_space<smem>>, %arg5: memref<1x8xf32, #tpu.memory_space<vmem>>) attributes {dimension_semantics = [#tpu.dimension_semantics<parallel>], iteration_bounds = array<i64: 1>, scalar_prefetch = 0 : i64, scratch_operands = 0 : i64, tpu.core_type = #tpu.core_type<tc>, window_params = [{transform_indices = @transform_0, window_bounds = array<i64: 8, 32>}, {pipeline_mode = #tpu.pipeline_mode<synchronous>, transform_indices = @transform_1, window_bounds = array<i64: 17, 32>}, {pipeline_mode = #tpu.pipeline_mode<synchronous>, transform_indices = @transform_2, window_bounds = array<i64: 32, 1>}, {transform_indices = @transform_3, window_bounds = array<i64: 1, 1>}, {transform_indices = @transform_4, window_bounds = array<i64: 1, 8>}]} {
    %c0 = arith.constant 0 : index
    %c0_0 = arith.constant 0 : index
    %0 = vector.load %arg2[%c0, %c0_0] : memref<17x32xf32, #tpu.memory_space<vmem>>, vector<17x32xf32>
    %c0_1 = arith.constant 0 : index
    %c0_2 = arith.constant 0 : index
    %1 = vector.load %arg3[%c0_1, %c0_2] : memref<32x1xf32, #tpu.memory_space<vmem>>, vector<32x1xf32>
    %c0_3 = arith.constant 0 : index
    %c0_4 = arith.constant 0 : index
    %2 = memref.load %arg4[%c0_3, %c0_4] : memref<1x1xf32, #tpu.memory_space<smem>>
    %c0_5 = arith.constant 0 : index
    %c0_6 = arith.constant 0 : index
    %3 = vector.load %arg1[%c0_5, %c0_6] : memref<8x32xf32, #tpu.memory_space<vmem>>, vector<8x32xf32>
    %4 = tpu.transpose %3, [1, 0] : vector<8x32xf32> -> vector<32x8xf32>
    %cst = arith.constant dense<0.000000e+00> : vector<17x8xf32>
    %5 = tpu.matmul %0, %4, %cst {dimension_numbers = #tpu.dot_dimension_numbers<[1], [0], [0], [1], [0, 0, 1, 1], [], []>} : vector<17x32xf32>, vector<32x8xf32>, vector<17x8xf32> -> vector<17x8xf32>
    %6 = arith.mulf %4, %4 : vector<32x8xf32>
    %7 = vector.broadcast %1 : vector<32x1xf32> to vector<32x8xf32>
    %8 = arith.mulf %6, %7 : vector<32x8xf32>
    %cst_7 = arith.constant dense<0.000000e+00> : vector<8xf32>
    %9 = vector.multi_reduction <add>, %8, %cst_7 [0] : vector<32x8xf32> to vector<8xf32>
    %10 = vector.shape_cast %9 : vector<8xf32> to vector<1x8xf32>
    %11 = vector.extract_strided_slice %5 {offsets = [16, 0], sizes = [1, 8], strides = [1, 1]} : vector<17x8xf32> to vector<1x8xf32>
    %12 = arith.mulf %5, %5 : vector<17x8xf32>
    %cst_8 = arith.constant dense<0.000000e+00> : vector<8xf32>
    %13 = vector.multi_reduction <add>, %12, %cst_8 [0] : vector<17x8xf32> to vector<8xf32>
    %14 = vector.shape_cast %13 : vector<8xf32> to vector<1x8xf32>
    %15 = arith.mulf %11, %11 : vector<1x8xf32>
    %16 = arith.subf %14, %15 : vector<1x8xf32>
    %17 = arith.subf %16, %10 : vector<1x8xf32>
    %cst_9 = arith.constant 5.000000e-01 : f32
    %18 = vector.broadcast %cst_9 : f32 to vector<1x8xf32>
    %19 = arith.mulf %18, %17 : vector<1x8xf32>
    %20 = vector.broadcast %2 : f32 to vector<1x8xf32>
    %21 = arith.addf %11, %20 : vector<1x8xf32>
    %22 = arith.addf %21, %19 : vector<1x8xf32>
    %c0_10 = arith.constant 0 : index
    %c0_11 = arith.constant 0 : index
    %23 = vector.load %arg5[%c0_10, %c0_11] : memref<1x8xf32, #tpu.memory_space<vmem>>, vector<1x8xf32>
    tpu.vector_store %arg5[%c0_10, %c0_11], %22 {strides = array<i32>} : memref<1x8xf32, #tpu.memory_space<vmem>>, vector<1x8xf32>,
    return
  }
  func.func @transform_0(%arg0: i32) -> (i32, i32) {
    %c0_i32 = arith.constant 0 : i32
    %c0_i32_0 = arith.constant 0 : i32
    return %arg0, %c0_i32 : i32, i32
  }
  func.func @transform_1(%arg0: i32) -> (i32, i32) {
    %c0_i32 = arith.constant 0 : i32
    %c0_i32_0 = arith.constant 0 : i32
    %c0_i32_1 = arith.constant 0 : i32
    return %c0_i32, %c0_i32_0 : i32, i32
  }
  func.func @transform_2(%arg0: i32) -> (i32, i32) {
    %c0_i32 = arith.constant 0 : i32
    %c0_i32_0 = arith.constant 0 : i32
    %c0_i32_1 = arith.constant 0 : i32
    return %c0_i32, %c0_i32_0 : i32, i32
  }
  func.func @transform_3(%arg0: i32) -> (i32, i32) {
    %c0_i32 = arith.constant 0 : i32
    %c0_i32_0 = arith.constant 0 : i32
    %c0_i32_1 = arith.constant 0 : i32
    return %c0_i32, %c0_i32_0 : i32, i32
  }
  func.func @transform_4(%arg0: i32) -> (i32, i32) {
    %c0_i32 = arith.constant 0 : i32
    %c0_i32_0 = arith.constant 0 : i32
    return %arg0, %c0_i32 : i32, i32
  }
}

</mosaic_0001>

<llo_original>
// kernel: tpu_custom_call.1
$region0: #{tpu_custom_call.1}
  #allocation0 [shape = 'u32[]', space=smem, size = 0x4, offset = 0x4, fixed_abs, tag = 'smem constant byte address 0x4 - core index']
  #allocation1 [shape = 'u32[144,128]{1,0:T(1,128)}', space=vmem, size = 0x12000, scoped, tag = 'internal scratch']
  #allocation2 [shape = 'f32[1,1]{1,0:T(1,128)S(6)}', space=smem, size = 0x200, scoped, tag = 'scoped memory for tpu_custom_call.1']
  %s0 = inlined_call_operand.vmem [shape: f32[8,32], index: 0, kind: input, shape index: {}]
  %s1 = inlined_call_operand.vmem [shape: f32[17,32], index: 1, kind: input, shape index: {}]
  %s2 = inlined_call_operand.vmem [shape: f32[32,1], index: 2, kind: input, shape index: {}]
  %s3 = inlined_call_operand.<no memory space> [shape: f32[1,1], index: 3, kind: input, shape index: {}]
  %s4 = inlined_call_operand.hbm [shape: f32[1,8], index: 4, kind: output, shape index: {}]
  %s5 = sld [smem:[#allocation0]]
  $region26: #{tpu_custom_call.1} parent=0
    _
  %s7 = ssub.s32 1, %s5
  %s8 = scalar_select 0, %s7, %s5
  %9 = sst [smem:[#allocation2]] %s3
  $region1: #{tpu_custom_call.1} parent=0
    #allocation3 [shape = 'u8[512]{0}', space=vmem, size = 0x400, scoped, tag = 'output window, operand 0, single buffered']
    #allocation4 [shape = 's32[1]{0}', space=sflag, size = 0x4, scoped, tag = 'scoped memory for tpu_custom_call.1']
    %10 = vsyncpa [#allocation4], 0
    // Predicated region
    $region2: #{tpu_custom_call.1} parent=1 // pred_check
      _
    $region3: #{tpu_custom_call.1} parent=1 // pred_check_branch
      %12 = sbr.rel (0) target = $region5
    $region4: #{tpu_custom_call.1} parent=1 // pred_region
      _
    $region5: #{tpu_custom_call.1} parent=1 // pred_fallthru
      _
    // Predicated region
    $region6: #{tpu_custom_call.1} parent=1 // pred_check
      _
    $region7: #{tpu_custom_call.1} parent=1 // pred_check_branch
      %14 = sbr.rel (0) target = $region9
    $region8: #{tpu_custom_call.1} parent=1 // pred_region
      _
    $region9: #{tpu_custom_call.1} parent=1 // pred_fallthru
      _
    // Predicated region
    $region10: #{tpu_custom_call.1} parent=1 // pred_check
      _
    $region11: #{tpu_custom_call.1} parent=1 // pred_check_branch
      %16 = sbr.rel (0) target = $region13
    $region12: #{tpu_custom_call.1} parent=1 // pred_region
      _
    $region13: #{tpu_custom_call.1} parent=1 // pred_fallthru
      _
    // Predicated region
    $region14: #{tpu_custom_call.1} parent=1 // pred_check
      _
    $region15: #{tpu_custom_call.1} parent=1 // pred_check_branch
      %18 = sbr.rel (0) target = $region17
    $region16: #{tpu_custom_call.1} parent=1 // pred_region
      _
    $region17: #{tpu_custom_call.1} parent=1 // pred_fallthru
      _
    %v19 = vld [vmem:[%s1] sm:$0xff]
    %v20 = vld [vmem:[%s1 + $0x8] sm:$0xff]
    %v21 = vld [vmem:[%s1 + $0x10] sm:$0x1]
    %v22 = vld [vmem:[%s2] sm:$0xff]
    %v23 = vld [vmem:[%s2 + $0x8] sm:$0xff]
    %v24 = vld [vmem:[%s2 + $0x10] sm:$0xff]
    %v25 = vld [vmem:[%s2 + $0x18] sm:$0xff]
    %s26 = sld [smem:[#allocation2]]
    %v27 = vld [vmem:[%s0] sm:$0xff]
    %28 = vxpose.xlu0.b32.start [1/16] %v27, 128
    %29 = vxpose.xlu0.b32.cont [2/16] 0.0, 128
    %30 = vxpose.xlu0.b32.cont [3/16] 0.0, 128
    %31 = vxpose.xlu0.b32.cont [4/16] 0.0, 128
    %32 = vxpose.xlu0.b32.cont [5/16] 0.0, 128
    %33 = vxpose.xlu0.b32.cont [6/16] 0.0, 128
    %34 = vxpose.xlu0.b32.cont [7/16] 0.0, 128
    %35 = vxpose.xlu0.b32.cont [8/16] 0.0, 128
    %36 = vxpose.xlu0.b32.cont [9/16] 0.0, 128
    %37 = vxpose.xlu0.b32.cont [10/16] 0.0, 128
    %38 = vxpose.xlu0.b32.cont [11/16] 0.0, 128
    %39 = vxpose.xlu0.b32.cont [12/16] 0.0, 128
    %40 = vxpose.xlu0.b32.cont [13/16] 0.0, 128
    %41 = vxpose.xlu0.b32.cont [14/16] 0.0, 128
    %42 = vxpose.xlu0.b32.cont [15/16] 0.0, 128
    %43 = vxpose.xlu0.b32.end [16/16] 0.0, 128
    %v44 = vpop.trf.xlu0
    %v45 = vpop.trf.xlu0
    %v46 = vpop.trf.xlu0
    %v47 = vpop.trf.xlu0
    %v48 = vpop.trf.xlu0
    %v49 = vpop.trf.xlu0
    %v50 = vpop.trf.xlu0
    %v51 = vpop.trf.xlu0
    %v52 = vpop.trf.xlu0
    %v53 = vpop.trf.xlu0
    %v54 = vpop.trf.xlu0
    %v55 = vpop.trf.xlu0
    %v56 = vpop.trf.xlu0
    %v57 = vpop.trf.xlu0
    %v58 = vpop.trf.xlu0
    %v59 = vpop.trf.xlu0
    %vm60 = vcmask 261120
    %v62 = vsel %vm60, %v19, 0
    %v65 = vsel %vm60, %v20, 0
    %v68 = vsel %vm60, %v21, 0
    %70 = vmatprep.subr.mxu0 0.0
    %71 = vmatpush1.msra.mxu0 %v44
    %72 = vmatprep.subr.mxu0 0.0
    %73 = vmatpush1.msra.mxu0 %v45
    %74 = vmatprep.subr.mxu0 0.0
    %75 = vmatpush1.msra.mxu0 %v46
    %76 = vmatprep.subr.mxu0 0.0
    %77 = vmatpush1.msra.mxu0 %v47
    %78 = vmatprep.subr.mxu0 0.0
    %79 = vmatpush1.msra.mxu0 0.0
    %80 = vmatprep.subr.mxu0 0.0
    %81 = vmatpush1.msra.mxu0 0.0
    %82 = vmatprep.subr.mxu0 0.0
    %83 = vmatpush1.msra.mxu0 0.0
    %84 = vmatprep.subr.mxu0 0.0
    %85 = vmatpush1.msra.mxu0 0.0
    %86 = vmatprep.subr.mxu0 0.0
    %87 = vmatpush1.msra.mxu0 0.0
    %88 = vmatprep.subr.mxu0 0.0
    %89 = vmatpush1.msra.mxu0 0.0
    %90 = vmatprep.subr.mxu0 0.0
    %91 = vmatpush1.msra.mxu0 0.0
    %92 = vmatprep.subr.mxu0 0.0
    %93 = vmatpush1.msra.mxu0 0.0
    %94 = vmatprep.subr.mxu0 0.0
    %95 = vmatpush1.msra.mxu0 0.0
    %96 = vmatprep.subr.mxu0 0.0
    %97 = vmatpush1.msra.mxu0 0.0
    %98 = vmatprep.subr.mxu0 0.0
    %99 = vmatpush1.msra.mxu0 0.0
    %100 = vmatprep.subr.mxu0 0.0
    %101 = vmatpush1.msra.mxu0 0.0
    %102 = vmatprep.subr.mxu0 0.0
    %103 = vmatpush1.msra.mxu0 0.0
    %104 = vmatprep.subr.mxu0 0.0
    %105 = vmatpush1.msra.mxu0 0.0
    %106 = vmatprep.subr.mxu0 0.0
    %107 = vmatpush1.msra.mxu0 0.0
    %108 = vmatprep.subr.mxu0 0.0
    %109 = vmatpush1.msra.mxu0 0.0
    %110 = vmatprep.subr.mxu0 0.0
    %111 = vmatpush1.msra.mxu0 0.0
    %112 = vmatprep.subr.mxu0 0.0
    %113 = vmatpush1.msra.mxu0 0.0
    %114 = vmatprep.subr.mxu0 0.0
    %115 = vmatpush1.msra.mxu0 0.0
    %116 = vmatprep.subr.mxu0 0.0
    %117 = vmatpush1.msra.mxu0 0.0
    %118 = vmatprep.subr.mxu0 0.0
    %119 = vmatpush1.msra.mxu0 0.0
    %120 = vmatprep.subr.mxu0 0.0
    %121 = vmatpush1.msra.mxu0 0.0
    %122 = vmatprep.subr.mxu0 0.0
    %123 = vmatpush1.msra.mxu0 0.0
    %124 = vmatprep.subr.mxu0 0.0
    %125 = vmatpush1.msra.mxu0 0.0
    %126 = vmatprep.subr.mxu0 0.0
    %127 = vmatpush1.msra.mxu0 0.0
    %128 = vmatprep.subr.mxu0 0.0
    %129 = vmatpush1.msra.mxu0 0.0
    %130 = vmatprep.subr.mxu0 0.0
    %131 = vmatpush1.msra.mxu0 0.0
    %132 = vmatprep.subr.mxu0 0.0
    %133 = vmatpush1.msra.mxu0 0.0
    %134 = vmatprep.mubr.f32.mxu0 0.0
    %135 = vmatmul.mubr.f32.gmra.mrb[0].mxu0 %v62
    %v136 = vpop.f32.mrb[0].mxu0
    %v137 = vadd.f32 0.0, %v136
    %v138 = vpop.f32.mrb[0].mxu0
    %139 = vmatprep.mubr.f32.mxu0 0.0
    %140 = vmatmul.mubr.f32.gmra.mrb[0].mxu0 %v65
    %v141 = vpop.f32.mrb[0].mxu0
    %v142 = vadd.f32 0.0, %v141
    %v143 = vpop.f32.mrb[0].mxu0
    %144 = vmatprep.mubr.f32.mxu0 0.0
    %145 = vmatmul.mubr.f32.gmra.mrb[0].mxu0 %v68
    %v146 = vpop.f32.mrb[0].mxu0
    %v147 = vadd.f32 0.0, %v146
    %v148 = vpop.f32.mrb[0].mxu0
    %149 = vdwg.mxu0
    %v150 = vmul.f32 %v44, %v44
    %v151 = vmul.f32 %v45, %v45
    %v152 = vmul.f32 %v46, %v46
    %v153 = vmul.f32 %v47, %v47
    %155 = vset.pattern.permute.xlu0 0
    %156 = vperm.xlu0 %155, %v22
    %v157 = vpop.permute.xlu0 %156
    %160 = vset.pattern.permute.xlu0 0
    %161 = vperm.xlu0 %160, %v23
    %v162 = vpop.permute.xlu0 %161
    %165 = vset.pattern.permute.xlu0 0
    %166 = vperm.xlu0 %165, %v24
    %v167 = vpop.permute.xlu0 %166
    %170 = vset.pattern.permute.xlu0 0
    %171 = vperm.xlu0 %170, %v25
    %v172 = vpop.permute.xlu0 %171
    %v174 = vmul.f32 %v150, %v157
    %v175 = vmul.f32 %v151, %v162
    %v176 = vmul.f32 %v152, %v167
    %v177 = vmul.f32 %v153, %v172
    %vm178 = vcmask 64512
    %v179 = vsel %vm178, %v174, 0.0
    %v180 = vsel %vm178, %v175, 0.0
    %v181 = vadd.f32 %v179, %v180
    %v182 = vsel %vm178, %v176, 0.0
    %v183 = vadd.f32 %v181, %v182
    %v184 = vsel %vm178, %v177, 0.0
    %v185 = vadd.f32 %v183, %v184
    %v186 = vrot.slane %v185, 4
    %v187 = vadd.f32 %v185, %v186
    %v188 = vrot.slane %v187, 2
    %v189 = vadd.f32 %v187, %v188
    %v190 = vrot.slane %v189, 1
    %v191 = vadd.f32 %v189, %v190
    %v192 = vmul.f32 %v137, %v137
    %v193 = vmul.f32 %v142, %v142
    %v194 = vmul.f32 %v147, %v147
    %v195 = vsel %vm178, %v192, 0.0
    %v196 = vsel %vm178, %v193, 0.0
    %v197 = vadd.f32 %v195, %v196
    %vm198 = vcmask 57344
    %v199 = vsel %vm198, %v194, 0.0
    %v200 = vadd.f32 %v197, %v199
    %v201 = vrot.slane %v200, 4
    %v202 = vadd.f32 %v200, %v201
    %v203 = vrot.slane %v202, 2
    %v204 = vadd.f32 %v202, %v203
    %v205 = vrot.slane %v204, 1
    %v206 = vadd.f32 %v204, %v205
    %v207 = vsub.f32 %v206, %v194
    %v208 = vsub.f32 %v207, %v191
    %v209 = vmul.f32 %v208, 0.5
    %v210 = vstv %s26
    %v211 = vadd.f32 %v147, %v210
    %v212 = vadd.f32 %v211, %v209
    %213 = vst.msk [vmem:[#allocation3] sm:$0x1] %vm198, %v212
    // Predicated region
    $region18: #{tpu_custom_call.1} parent=1 // pred_check
      _
    $region19: #{tpu_custom_call.1} parent=1 // pred_check_branch
      %215 = sbr.rel (0) target = $region21
    $region20: #{tpu_custom_call.1} parent=1 // pred_region
      %s217 = ssub.s32 16, 16
      %218 = vsyncadd [#allocation4], %s217
      %s220 = sshll.u32 [#allocation3], 4
      %s221 = int_to_ptr.vmem [resolvable:$true] %s220
      %223 = dma.vmem_to_hbm [thread:$0]  %s221, 16, %s4, [#allocation4]
    $region21: #{tpu_custom_call.1} parent=1 // pred_fallthru
      _
    // Predicated region
    $region22: #{tpu_custom_call.1} parent=1 // pred_check
      _
    $region23: #{tpu_custom_call.1} parent=1 // pred_check_branch
      %225 = sbr.rel (0) target = $region25
    $region24: #{tpu_custom_call.1} parent=1 // pred_region
      %226 = dma.done [#allocation4], 16
    $region25: #{tpu_custom_call.1} parent=1 // pred_fallthru
      _
    %227 = vsyncpa [#allocation4], 1

</llo_original>
